<compile_context>
chip_gen: v7x
topology: tpu7x:2x2x1
jax: 0.10.0
libtpu: 0.0.40
codegen_flags: <defaults>
</compile_context>

<pallas_src>
import functools

import jax
import jax.numpy as jnp
from jax import lax
from jax.experimental import pallas as pl
from jax.experimental.pallas import tpu as pltpu

_EPS = 1e-4          # per-vector norm clamp (product of clamps >= torch's 1e-8)
_NEG_INF = -1e30     # finite "minus infinity" for padded-column masking
_LANE = 128


def _round_up(x, m):
    return ((x + m - 1) // m) * m


# ----------------------------------------------------------------------------- #
# VMEM / tile budgeting (generation aware)
# ----------------------------------------------------------------------------- #

def _loss_vmem_bytes(tile, n_pad, d_pad):
    resident = n_pad * d_pad * 2            # bf16 centroid^T panel (single copy)
    q_pipe = 2 * tile * d_pad * 4           # double-buffered query tile (f32)
    lbl_pipe = 2 * tile * _LANE * 4         # label tile (lane-padded in VMEM)
    outs = 2 * 2 * 8 * _LANE * 4            # two tiny per-tile partial-sum blocks
    temps = 6 * tile * n_pad * 4            # cos/logits/shifted/exp/iota/compares
    return resident + q_pipe + lbl_pipe + outs + temps


def _centroid_vmem_bytes(tile, d_pad, n_shots):
    shots_pipe = 2 * (n_shots - 1) * tile * d_pad * 4   # double-buffered shot slab
    out_pipe = 2 * d_pad * tile * 2                     # bf16 output tile
    temps = 2 * tile * d_pad * 4                        # centroid + transpose temp
    return shots_pipe + out_pipe + temps


def _pick_tile_and_vmem(n, d_pad, n_shots):
    """Pick the query-row tile and the scoped-VMEM limit for this chip."""
    vmem_cap = 64 * 1024 * 1024                 # conservative default (v7x per-TC)
    try:
        vmem_cap = int(pltpu.get_tpu_info().vmem_capacity_bytes)
    except Exception:
        pass

    small_mxu = False                           # v5e and older: 128-wide MXU
    try:
        kind = jax.devices()[0].device_kind.lower()
        small_mxu = any(g in kind for g in ("v2", "v3", "v4", "v5"))
    except Exception:
        pass

    tile = 128 if small_mxu else 256            # fill the 256-wide MXU on v6e/v7x
    tile = min(tile, _round_up(max(n, 1), 128))  # don't over-pad tiny problems

    def footprint(t):
        n_pad = _round_up(n, t)
        return max(_loss_vmem_bytes(t, n_pad, d_pad),
                   _centroid_vmem_bytes(t, d_pad, n_shots))

    budget = int(0.75 * vmem_cap)
    while tile > 128 and footprint(tile) > budget:
        tile //= 2
    # TODO(synk): if even tile=128 exceeds the budget (huge N*D, dominated by the
    # resident bf16 centroid panel on v7x's 64 MiB/TC), add a centroid-column grid
    # axis ("arbitrary") with flash-style online-softmax accumulators instead of
    # keeping the full panel resident.

    needed = footprint(tile)
    vmem_limit = max(32 * 1024 * 1024,
                     min(needed + (8 << 20), int(0.9 * vmem_cap)))
    return tile, vmem_limit


# ----------------------------------------------------------------------------- #
# Kernel 1: per-class centroid (mean over shots 1..S-1), L2-normalize, transpose,
#           cast to bf16. One column tile of the (d_pad, n_pad) cnorm^T panel.
# ----------------------------------------------------------------------------- #

def _centroid_kernel(shots_ref, ct_ref):
    """shots_ref: (S-1, T, Dp) f32   ct_ref: (Dp, T) bf16."""
    shots = shots_ref[...]
    inv_shots = jnp.float32(1.0 / shots.shape[0])
    centroid = jnp.sum(shots, axis=0) * inv_shots                     # (T, Dp)
    sq = jnp.sum(centroid * centroid, axis=-1, keepdims=True)         # (T, 1)
    inv = lax.rsqrt(jnp.maximum(sq, jnp.float32(_EPS * _EPS)))        # EUP, ~free
    cnorm = centroid * inv                                            # (T, Dp)
    # One-shot transpose here (XLU) so the hot loss loop never relayouts the RHS.
    ct_ref[...] = jnp.transpose(cnorm, (1, 0)).astype(jnp.bfloat16)   # (Dp, T)


# ----------------------------------------------------------------------------- #
# Kernel 2: cosine matmul + cross-entropy + top-1 for one tile of query rows.
# ----------------------------------------------------------------------------- #

def _loss_kernel(n_valid, w_ref, b_ref, q_ref, ct_ref, label_ref,
                 loss_ref, corr_ref):
    """
    q_ref:     (T, Dp)  f32   query tile (pipelined)
    ct_ref:    (Dp, Np) bf16  normalized centroids^T, resident (single VMEM copy)
    label_ref: (T, 1)   i32   labels for this tile (-1 marks padded rows)
    loss_ref / corr_ref: (1, 8, 128) f32 per-tile partial sums (lane-dense store)
    """
    q = q_ref[...]
    t = q.shape[0]
    n_pad = ct_ref.shape[1]

    # Normalize query rows (rsqrt -> EUP), cast to bf16, one bf16 MXU pass.
    sq = jnp.sum(q * q, axis=-1, keepdims=True)
    qn = (q * lax.rsqrt(jnp.maximum(sq, jnp.float32(_EPS * _EPS)))
          ).astype(jnp.bfloat16)
    cos = jnp.dot(qn, ct_ref[...], preferred_element_type=jnp.float32)  # (T, Np)

    w = w_ref[0, 0]
    b = b_ref[0, 0]
    col = lax.broadcasted_iota(jnp.int32, (t, n_pad), 1)
    # Fused affine + padded-column mask: single (T, Np) logits buffer.
    logits = jnp.where(col < n_valid, w * cos + b, jnp.float32(_NEG_INF))

    row_max = jnp.max(logits, axis=-1, keepdims=True)
    shifted = logits - row_max                                          # reused 3x
    sum_p = jnp.sum(jnp.exp(shifted), axis=-1, keepdims=True)           # (T, 1)

    label = label_ref[...]                                              # (T, 1)
    target_shifted = jnp.sum(jnp.where(col == label, shifted, 0.0),
                             axis=-1, keepdims=True)
    valid_row = label >= 0
    # lse - target_logit == log(sum_p) - target_shifted (row_max cancels).
    row_loss = jnp.where(valid_row, jnp.log(sum_p) - target_shifted, 0.0)

    # First-occurrence argmax straight from `shifted` (max element is exactly 0).
    pred = jnp.min(jnp.where(shifted == 0.0, col, n_pad), axis=-1, keepdims=True)
    row_corr = (pred == label).astype(jnp.float32)                      # 0 for pads

    # Per-tile partial sums, broadcast into a dense (1, 8, 128) block so the
    # store is an unmasked, lane-dense vst (wrapper reads [:, 0, 0]).
    loss_ref[...] = jnp.broadcast_to(
        jnp.sum(row_loss, axis=0, keepdims=True)[None], loss_ref.shape)
    corr_ref[...] = jnp.broadcast_to(
        jnp.sum(row_corr, axis=0, keepdims=True)[None], corr_ref.shape)


# ----------------------------------------------------------------------------- #
# Wrapper
# ----------------------------------------------------------------------------- #

def angular_prototypical_loss(support, w, b, label=None):
    """Forward pass of AngularPrototypicalLoss. Returns (loss, acc_percent)."""
    support = jnp.asarray(support, jnp.float32)
    B, n_ways, n_shots, D = support.shape
    assert n_shots >= 2
    N = B * n_ways

    if label is None:
        # PyTorch default: label = arange(n_ways); only consistent when B == 1.
        assert B == 1, "default label (arange(n_ways)) requires batch size 1"
        label = jnp.arange(n_ways, dtype=jnp.int32)
    label = jnp.asarray(label, jnp.int32).reshape(N)

    d_pad = _round_up(D, _LANE)
    tile_n, vmem_limit = _pick_tile_and_vmem(N, d_pad, n_shots)
    n_pad = _round_up(N, tile_n)
    n_tiles = n_pad // tile_n
    grid = (n_tiles,)

    # (B, W, S, D) -> (S, N, D): shots leading, rows/features are the dense
    # sublane/lane dims; zero-pad N and D (exact for dot products and norms).
    sup = jnp.transpose(support.reshape(N, n_shots, D), (1, 0, 2))
    sup = jnp.pad(sup, ((0, 0), (0, n_pad - N), (0, d_pad - D)))
    query = sup[0]               # (Np, Dp)
    shots = sup[1:]              # (S-1, Np, Dp)
    label_pad = jnp.pad(label, (0, n_pad - N), constant_values=-1).reshape(n_pad, 1)

    w_arr = jnp.asarray(w, jnp.float32).reshape(1, 1)
    b_arr = jnp.asarray(b, jnp.float32).reshape(1, 1)

    cparams = pltpu.CompilerParams(
        dimension_semantics=("parallel",),
        vmem_limit_bytes=vmem_limit,
    )

    # Kernel 1: normalized centroid^T panel in bf16, column-tiled.
    ct = pl.pallas_call(
        _centroid_kernel,
        out_shape=jax.ShapeDtypeStruct((d_pad, n_pad), jnp.bfloat16),
        grid_spec=pltpu.PrefetchScalarGridSpec(
            num_scalar_prefetch=0,
            grid=grid,
            in_specs=[pl.BlockSpec((n_shots - 1, tile_n, d_pad),
                                   lambda i: (0, i, 0))],
            out_specs=pl.BlockSpec((d_pad, tile_n), lambda i: (0, i)),
        ),
        compiler_params=cparams,
    )(shots)

    # Kernel 2: tiled cosine matrix + CE + accuracy; centroid^T stays resident
    # in VMEM as a single (not double-buffered) bf16 copy.
    cost = pl.CostEstimate(
        flops=2 * n_pad * n_pad * d_pad + 12 * n_pad * n_pad,
        transcendentals=n_pad * n_pad + 2 * n_pad,
        bytes_accessed=(4 * n_pad * d_pad            # query (f32)
                        + 2 * n_pad * d_pad          # centroid^T (bf16)
                        + 4 * n_pad                  # labels
                        + 2 * 4 * 8 * _LANE * n_tiles),  # partial-sum outputs
    )
    loss_tiles, corr_tiles = pl.pallas_call(
        functools.partial(_loss_kernel, N),
        out_shape=(
            jax.ShapeDtypeStruct((n_tiles, 8, _LANE), jnp.float32),
            jax.ShapeDtypeStruct((n_tiles, 8, _LANE), jnp.float32),
        ),
        grid_spec=pltpu.PrefetchScalarGridSpec(
            num_scalar_prefetch=0,
            grid=grid,
            in_specs=[
                pl.BlockSpec(memory_space=pltpu.MemorySpace.SMEM),   # w
                pl.BlockSpec(memory_space=pltpu.MemorySpace.SMEM),   # b
                pl.BlockSpec((tile_n, d_pad), lambda i: (i, 0)),     # query tile
                pl.BlockSpec(memory_space=pltpu.MemorySpace.VMEM),   # centroid^T (resident, single copy)
                pl.BlockSpec((tile_n, 1), lambda i: (i, 0)),         # labels
            ],
            out_specs=[
                pl.BlockSpec((1, 8, _LANE), lambda i: (i, 0, 0)),    # per-tile loss sum
                pl.BlockSpec((1, 8, _LANE), lambda i: (i, 0, 0)),    # per-tile correct sum
            ],
        ),
        compiler_params=cparams,
        cost_estimate=cost,
    )(w_arr, b_arr, query, ct, label_pad)

    # Padded rows contribute exactly 0, so the per-tile sums are exact.
    loss = jnp.sum(loss_tiles[:, 0, 0]) / jnp.float32(N)
    acc = 100.0 * jnp.sum(corr_tiles[:, 0, 0]) / jnp.float32(N)
    return loss, acc


# ----------------------------------------------------------------------------- #
# Pure-JAX reference mirroring the PyTorch module (for self-check)
# ----------------------------------------------------------------------------- #

def _reference(support, w, b, label=None):
    support = jnp.asarray(support, jnp.float32)
    B, W, S, D = support.shape
    N = B * W
    q = support[:, :, 0, :].reshape(N, D)
    c = jnp.mean(support[:, :, 1:, :], axis=2).reshape(N, D)
    num = q @ c.T
    den = jnp.maximum(
        jnp.linalg.norm(q, axis=1, keepdims=True)
        * jnp.linalg.norm(c, axis=1, keepdims=True).T,
        1e-8,
    )
    logits = w * (num / den) + b
    if label is None:
        label = jnp.arange(W, dtype=jnp.int32)
    lse = jax.nn.logsumexp(logits, axis=1)
    loss = jnp.mean(lse - logits[jnp.arange(N), label])
    acc = 100.0 * jnp.mean((jnp.argmax(logits, axis=1) == label).astype(jnp.float32))
    return loss, acc


if __name__ == "__main__":
    init_scale = jnp.float32(10.0)   # self.w
    init_bias = jnp.float32(-5.0)    # self.b

    # Small deterministic example: batch=1, n_ways=8, n_shots=3, dim=64.
    # Class-structured data (mean + noise) so the argmax margins are far larger
    # than the bf16 MXU rounding error.
    key = jax.random.PRNGKey(0)
    k_mean, k_noise = jax.random.split(key)
    n_ways, n_shots, dim = 8, 3, 64
    class_means = jax.random.normal(k_mean, (1, n_ways, 1, dim), dtype=jnp.float32)
    noise = jax.random.normal(k_noise, (1, n_ways, n_shots, dim), dtype=jnp.float32)
    support = class_means + 0.35 * noise

    loss, acc = angular_prototypical_loss(support, init_scale, init_bias)
    jax.block_until_ready((loss, acc))

    ref_loss, ref_acc = _reference(support, init_scale, init_bias)
    # Loss tolerance loosened vs the f32 reference because the cosine matrix is
    # computed from bf16 operands (f32 accumulate).
    assert jnp.allclose(loss, ref_loss, rtol=5e-2, atol=5e-2), (loss, ref_loss)
    assert jnp.allclose(acc, ref_acc, rtol=1e-3, atol=1e-3), (acc, ref_acc)

    print("KERNEL_OK")
</pallas_src>

<mosaic_0001>
module attributes {stable_mosaic.version = 11 : i64} {
  func.func @_centroid_kernel(%arg0: i32, %arg1: memref<2x128x128xf32, #tpu.memory_space<vmem>>, %arg2: memref<128x128xbf16, #tpu.memory_space<vmem>>) attributes {dimension_semantics = [#tpu.dimension_semantics<parallel>], iteration_bounds = array<i64: 1>, scalar_prefetch = 0 : i64, scratch_operands = 0 : i64, tpu.core_type = #tpu.core_type<tc>, window_params = [{transform_indices = @transform_0, window_bounds = array<i64: 2, 128, 128>}, {transform_indices = @transform_1, window_bounds = array<i64: 128, 128>}]} {
    %c0 = arith.constant 0 : index
    %c0_0 = arith.constant 0 : index
    %c0_1 = arith.constant 0 : index
    %0 = vector.load %arg1[%c0, %c0_0, %c0_1] : memref<2x128x128xf32, #tpu.memory_space<vmem>>, vector<2x128x128xf32>
    %cst = arith.constant dense<0.000000e+00> : vector<128x128xf32>
    %1 = vector.multi_reduction <add>, %0, %cst [0] : vector<2x128x128xf32> to vector<128x128xf32>
    %cst_2 = arith.constant 5.000000e-01 : f32
    %2 = vector.broadcast %cst_2 : f32 to vector<128x128xf32>
    %3 = arith.mulf %1, %2 : vector<128x128xf32>
    %4 = arith.mulf %3, %3 : vector<128x128xf32>
    %cst_3 = arith.constant dense<0.000000e+00> : vector<128xf32>
    %5 = vector.multi_reduction <add>, %4, %cst_3 [1] : vector<128x128xf32> to vector<128xf32>
    %6 = vector.shape_cast %5 : vector<128xf32> to vector<128x1xf32>
    %cst_4 = arith.constant 9.99999993E-9 : f32
    %7 = vector.broadcast %cst_4 : f32 to vector<128x1xf32>
    %8 = arith.maximumf %6, %7 : vector<128x1xf32>
    %9 = math.rsqrt %8 : vector<128x1xf32>
    %10 = vector.broadcast %9 : vector<128x1xf32> to vector<128x128xf32>
    %11 = arith.mulf %3, %10 : vector<128x128xf32>
    %12 = tpu.transpose %11, [1, 0] : vector<128x128xf32> -> vector<128x128xf32>
    %13 = arith.truncf %12 : vector<128x128xf32> to vector<128x128xbf16>
    %c0_5 = arith.constant 0 : index
    %c0_6 = arith.constant 0 : index
    %14 = vector.load %arg2[%c0_5, %c0_6] : memref<128x128xbf16, #tpu.memory_space<vmem>>, vector<128x128xbf16>
    tpu.vector_store %arg2[%c0_5, %c0_6], %13 {strides = array<i32>} : memref<128x128xbf16, #tpu.memory_space<vmem>>, vector<128x128xbf16>,
    return
  }
  func.func @transform_0(%arg0: i32) -> (i32, i32, i32) {
    %c0_i32 = arith.constant 0 : i32
    %c0_i32_0 = arith.constant 0 : i32
    %c0_i32_1 = arith.constant 0 : i32
    return %c0_i32, %arg0, %c0_i32_0 : i32, i32, i32
  }
  func.func @transform_1(%arg0: i32) -> (i32, i32) {
    %c0_i32 = arith.constant 0 : i32
    %c0_i32_0 = arith.constant 0 : i32
    return %c0_i32, %arg0 : i32, i32
  }
}

</mosaic_0001>

<llo_original>
// kernel: tpu_custom_call.1
$region0: #{tpu_custom_call.1}
  #allocation0 [shape = 'u32[]', space=smem, size = 0x4, offset = 0x4, fixed_abs, tag = 'smem constant byte address 0x4 - core index']
  #allocation1 [shape = 'u32[144,128]{1,0:T(1,128)}', space=vmem, size = 0x12000, scoped, tag = 'internal scratch']
  %s0 = inlined_call_operand.hbm [shape: f32[2,128,128], index: 0, kind: input, shape index: {}]
  %s1 = inlined_call_operand.hbm [shape: bf16[128,128], index: 1, kind: output, shape index: {}]
  %s2 = sld [smem:[#allocation0]]
  $region18: #{tpu_custom_call.1} parent=0
    _
  %s4 = ssub.s32 1, %s2
  %s5 = scalar_select 0, %s4, %s2
  $region1: #{tpu_custom_call.1} parent=0
    #allocation2 [shape = 'u8[131072]{0}', space=vmem, size = 0x20000, scoped, tag = 'input window, operand 0, single buffered']
    #allocation3 [shape = 's32[1]{0}', space=sflag, size = 0x4, scoped, tag = 'scoped memory for tpu_custom_call.1']
    #allocation4 [shape = 's32[1]{0}', space=sflag, size = 0x4, scoped, tag = 'scoped memory for tpu_custom_call.1']
    #allocation5 [shape = 'u8[32768]{0}', space=vmem, size = 0x8000, scoped, tag = 'output window, operand 0, single buffered']
    %6 = vsyncpa [#allocation3], 0
    %7 = vsyncpa [#allocation4], 0
    // Predicated region
    $region2: #{tpu_custom_call.1} parent=1 // pred_check
      _
    $region3: #{tpu_custom_call.1} parent=1 // pred_check_branch
      %9 = sbr.rel (0) target = $region5
    $region4: #{tpu_custom_call.1} parent=1 // pred_region
      %s11 = ssub.s32 4096, 4096
      %12 = vsyncadd [#allocation3], %s11
      %s13 = sshll.u32 [#allocation2], 4
      %s14 = int_to_ptr.vmem [resolvable:$true] %s13
      %19 = dma.hbm_to_vmem [thread:$0]  %s0, 4096, %s14, [#allocation3], 128, 128, 8
    $region5: #{tpu_custom_call.1} parent=1 // pred_fallthru
      _
    // Predicated region
    $region6: #{tpu_custom_call.1} parent=1 // pred_check
      _
    $region7: #{tpu_custom_call.1} parent=1 // pred_check_branch
      %21 = sbr.rel (0) target = $region9
    $region8: #{tpu_custom_call.1} parent=1 // pred_region
      %22 = dma.done [#allocation3], 4096
    $region9: #{tpu_custom_call.1} parent=1 // pred_fallthru
      _
    %v23 = vld [vmem:[#allocation2] sm:$0xff]
    %v24 = vld [vmem:[#allocation2 + $0x8] sm:$0xff]
    %v25 = vld [vmem:[#allocation2 + $0x10] sm:$0xff]
    %v26 = vld [vmem:[#allocation2 + $0x18] sm:$0xff]
    %v27 = vld [vmem:[#allocation2 + $0x20] sm:$0xff]
    %v28 = vld [vmem:[#allocation2 + $0x28] sm:$0xff]
    %v29 = vld [vmem:[#allocation2 + $0x30] sm:$0xff]
    %v30 = vld [vmem:[#allocation2 + $0x38] sm:$0xff]
    %v31 = vld [vmem:[#allocation2 + $0x40] sm:$0xff]
    %v32 = vld [vmem:[#allocation2 + $0x48] sm:$0xff]
    %v33 = vld [vmem:[#allocation2 + $0x50] sm:$0xff]
    %v34 = vld [vmem:[#allocation2 + $0x58] sm:$0xff]
    %v35 = vld [vmem:[#allocation2 + $0x60] sm:$0xff]
    %v36 = vld [vmem:[#allocation2 + $0x68] sm:$0xff]
    %v37 = vld [vmem:[#allocation2 + $0x70] sm:$0xff]
    %v38 = vld [vmem:[#allocation2 + $0x78] sm:$0xff]
    %v39 = vld [vmem:[#allocation2 + $0x80] sm:$0xff]
    %v40 = vld [vmem:[#allocation2 + $0x88] sm:$0xff]
    %v41 = vld [vmem:[#allocation2 + $0x90] sm:$0xff]
    %v42 = vld [vmem:[#allocation2 + $0x98] sm:$0xff]
    %v43 = vld [vmem:[#allocation2 + $0xa0] sm:$0xff]
    %v44 = vld [vmem:[#allocation2 + $0xa8] sm:$0xff]
    %v45 = vld [vmem:[#allocation2 + $0xb0] sm:$0xff]
    %v46 = vld [vmem:[#allocation2 + $0xb8] sm:$0xff]
    %v47 = vld [vmem:[#allocation2 + $0xc0] sm:$0xff]
    %v48 = vld [vmem:[#allocation2 + $0xc8] sm:$0xff]
    %v49 = vld [vmem:[#allocation2 + $0xd0] sm:$0xff]
    %v50 = vld [vmem:[#allocation2 + $0xd8] sm:$0xff]
    %v51 = vld [vmem:[#allocation2 + $0xe0] sm:$0xff]
    %v52 = vld [vmem:[#allocation2 + $0xe8] sm:$0xff]
    %v53 = vld [vmem:[#allocation2 + $0xf0] sm:$0xff]
    %v54 = vld [vmem:[#allocation2 + $0xf8] sm:$0xff]
    %v55 = vadd.f32 %v23, %v39
    %v56 = vadd.f32 %v24, %v40
    %v57 = vadd.f32 %v25, %v41
    %v58 = vadd.f32 %v26, %v42
    %v59 = vadd.f32 %v27, %v43
    %v60 = vadd.f32 %v28, %v44
    %v61 = vadd.f32 %v29, %v45
    %v62 = vadd.f32 %v30, %v46
    %v63 = vadd.f32 %v31, %v47
    %v64 = vadd.f32 %v32, %v48
    %v65 = vadd.f32 %v33, %v49
    %v66 = vadd.f32 %v34, %v50
    %v67 = vadd.f32 %v35, %v51
    %v68 = vadd.f32 %v36, %v52
    %v69 = vadd.f32 %v37, %v53
    %v70 = vadd.f32 %v38, %v54
    %v71 = vmul.f32 %v55, 0.5
    %v72 = vmul.f32 %v56, 0.5
    %v73 = vmul.f32 %v57, 0.5
    %v74 = vmul.f32 %v58, 0.5
    %v75 = vmul.f32 %v59, 0.5
    %v76 = vmul.f32 %v60, 0.5
    %v77 = vmul.f32 %v61, 0.5
    %v78 = vmul.f32 %v62, 0.5
    %v79 = vmul.f32 %v63, 0.5
    %v80 = vmul.f32 %v64, 0.5
    %v81 = vmul.f32 %v65, 0.5
    %v82 = vmul.f32 %v66, 0.5
    %v83 = vmul.f32 %v67, 0.5
    %v84 = vmul.f32 %v68, 0.5
    %v85 = vmul.f32 %v69, 0.5
    %v86 = vmul.f32 %v70, 0.5
    %v87 = vmul.f32 %v71, %v71
    %v88 = vmul.f32 %v72, %v72
    %v89 = vmul.f32 %v73, %v73
    %v90 = vmul.f32 %v74, %v74
    %v91 = vmul.f32 %v75, %v75
    %v92 = vmul.f32 %v76, %v76
    %v93 = vmul.f32 %v77, %v77
    %v94 = vmul.f32 %v78, %v78
    %v95 = vmul.f32 %v79, %v79
    %v96 = vmul.f32 %v80, %v80
    %v97 = vmul.f32 %v81, %v81
    %v98 = vmul.f32 %v82, %v82
    %v99 = vmul.f32 %v83, %v83
    %v100 = vmul.f32 %v84, %v84
    %v101 = vmul.f32 %v85, %v85
    %v102 = vmul.f32 %v86, %v86
    %103 = vadd.xlane.f32.xlu0 %v87
    %v104 = vpop.xlane.xlu0 %103
    %105 = vadd.xlane.f32.xlu0 %v88
    %v106 = vpop.xlane.xlu0 %105
    %107 = vadd.xlane.f32.xlu0 %v89
    %v108 = vpop.xlane.xlu0 %107
    %109 = vadd.xlane.f32.xlu0 %v90
    %v110 = vpop.xlane.xlu0 %109
    %111 = vadd.xlane.f32.xlu0 %v91
    %v112 = vpop.xlane.xlu0 %111
    %113 = vadd.xlane.f32.xlu0 %v92
    %v114 = vpop.xlane.xlu0 %113
    %115 = vadd.xlane.f32.xlu0 %v93
    %v116 = vpop.xlane.xlu0 %115
    %117 = vadd.xlane.f32.xlu0 %v94
    %v118 = vpop.xlane.xlu0 %117
    %119 = vadd.xlane.f32.xlu0 %v95
    %v120 = vpop.xlane.xlu0 %119
    %121 = vadd.xlane.f32.xlu0 %v96
    %v122 = vpop.xlane.xlu0 %121
    %123 = vadd.xlane.f32.xlu0 %v97
    %v124 = vpop.xlane.xlu0 %123
    %125 = vadd.xlane.f32.xlu0 %v98
    %v126 = vpop.xlane.xlu0 %125
    %127 = vadd.xlane.f32.xlu0 %v99
    %v128 = vpop.xlane.xlu0 %127
    %129 = vadd.xlane.f32.xlu0 %v100
    %v130 = vpop.xlane.xlu0 %129
    %131 = vadd.xlane.f32.xlu0 %v101
    %v132 = vpop.xlane.xlu0 %131
    %133 = vadd.xlane.f32.xlu0 %v102
    %v134 = vpop.xlane.xlu0 %133
    %v135 = vmax.f32 %v104, 1e-08
    %v136 = vmax.f32 %v106, 1e-08
    %v137 = vmax.f32 %v108, 1e-08
    %v138 = vmax.f32 %v110, 1e-08
    %v139 = vmax.f32 %v112, 1e-08
    %v140 = vmax.f32 %v114, 1e-08
    %v141 = vmax.f32 %v116, 1e-08
    %v142 = vmax.f32 %v118, 1e-08
    %v143 = vmax.f32 %v120, 1e-08
    %v144 = vmax.f32 %v122, 1e-08
    %v145 = vmax.f32 %v124, 1e-08
    %v146 = vmax.f32 %v126, 1e-08
    %v147 = vmax.f32 %v128, 1e-08
    %v148 = vmax.f32 %v130, 1e-08
    %v149 = vmax.f32 %v132, 1e-08
    %v150 = vmax.f32 %v134, 1e-08
    %v151 = vrsqrt.pop %v135
    %v152 = vrsqrt.pop %v136
    %v153 = vrsqrt.pop %v137
    %v154 = vrsqrt.pop %v138
    %v155 = vrsqrt.pop %v139
    %v156 = vrsqrt.pop %v140
    %v157 = vrsqrt.pop %v141
    %v158 = vrsqrt.pop %v142
    %v159 = vrsqrt.pop %v143
    %v160 = vrsqrt.pop %v144
    %v161 = vrsqrt.pop %v145
    %v162 = vrsqrt.pop %v146
    %v163 = vrsqrt.pop %v147
    %v164 = vrsqrt.pop %v148
    %v165 = vrsqrt.pop %v149
    %v166 = vrsqrt.pop %v150
    %v167 = vmul.f32 %v71, %v151
    %v168 = vmul.f32 %v72, %v152
    %v169 = vmul.f32 %v73, %v153
    %v170 = vmul.f32 %v74, %v154
    %v171 = vmul.f32 %v75, %v155
    %v172 = vmul.f32 %v76, %v156
    %v173 = vmul.f32 %v77, %v157
    %v174 = vmul.f32 %v78, %v158
    %v175 = vmul.f32 %v79, %v159
    %v176 = vmul.f32 %v80, %v160
    %v177 = vmul.f32 %v81, %v161
    %v178 = vmul.f32 %v82, %v162
    %v179 = vmul.f32 %v83, %v163
    %v180 = vmul.f32 %v84, %v164
    %v181 = vmul.f32 %v85, %v165
    %v182 = vmul.f32 %v86, %v166
    %183 = vxpose.xlu0.b32.start [1/16] %v167, 128
    %184 = vxpose.xlu0.b32.cont [2/16] %v168, 128
    %185 = vxpose.xlu0.b32.cont [3/16] %v169, 128
    %186 = vxpose.xlu0.b32.cont [4/16] %v170, 128
    %187 = vxpose.xlu0.b32.cont [5/16] %v171, 128
    %188 = vxpose.xlu0.b32.cont [6/16] %v172, 128
    %189 = vxpose.xlu0.b32.cont [7/16] %v173, 128
    %190 = vxpose.xlu0.b32.cont [8/16] %v174, 128
    %191 = vxpose.xlu0.b32.cont [9/16] %v175, 128
    %192 = vxpose.xlu0.b32.cont [10/16] %v176, 128
    %193 = vxpose.xlu0.b32.cont [11/16] %v177, 128
    %194 = vxpose.xlu0.b32.cont [12/16] %v178, 128
    %195 = vxpose.xlu0.b32.cont [13/16] %v179, 128
    %196 = vxpose.xlu0.b32.cont [14/16] %v180, 128
    %197 = vxpose.xlu0.b32.cont [15/16] %v181, 128
    %198 = vxpose.xlu0.b32.end [16/16] %v182, 128
    %v199 = vpop.trf.xlu0
    %v200 = vpop.trf.xlu0
    %v201 = vpop.trf.xlu0
    %v202 = vpop.trf.xlu0
    %v203 = vpop.trf.xlu0
    %v204 = vpop.trf.xlu0
    %v205 = vpop.trf.xlu0
    %v206 = vpop.trf.xlu0
    %v207 = vpop.trf.xlu0
    %v208 = vpop.trf.xlu0
    %v209 = vpop.trf.xlu0
    %v210 = vpop.trf.xlu0
    %v211 = vpop.trf.xlu0
    %v212 = vpop.trf.xlu0
    %v213 = vpop.trf.xlu0
    %v214 = vpop.trf.xlu0
    %v215 = vpack.c.bf16 %v200, %v199
    %v216 = vpack.c.bf16 %v202, %v201
    %v217 = vpack.c.bf16 %v204, %v203
    %v218 = vpack.c.bf16 %v206, %v205
    %v219 = vpack.c.bf16 %v208, %v207
    %v220 = vpack.c.bf16 %v210, %v209
    %v221 = vpack.c.bf16 %v212, %v211
    %v222 = vpack.c.bf16 %v214, %v213
    %v231 = vunpack.c.l.b16 %v215
    %v232 = vunpack.c.h.b16 %v215
    %v233 = vunpack.c.l.b16 %v216
    %v234 = vunpack.c.h.b16 %v216
    %v235 = vunpack.c.l.b16 %v217
    %v236 = vunpack.c.h.b16 %v217
    %v237 = vunpack.c.l.b16 %v218
    %v238 = vunpack.c.h.b16 %v218
    %v239 = vunpack.c.l.b16 %v219
    %v240 = vunpack.c.h.b16 %v219
    %v241 = vunpack.c.l.b16 %v220
    %v242 = vunpack.c.h.b16 %v220
    %v243 = vunpack.c.l.b16 %v221
    %v244 = vunpack.c.h.b16 %v221
    %v245 = vunpack.c.l.b16 %v222
    %v246 = vunpack.c.h.b16 %v222
    %v247 = vpack.c.b16 %v231, %v231
    %v248 = vpack.c.b16 %v232, %v232
    %v249 = vpack.c.b16 %v233, %v233
    %v250 = vpack.c.b16 %v234, %v234
    %v251 = vpack.c.b16 %v235, %v235
    %v252 = vpack.c.b16 %v236, %v236
    %v253 = vpack.c.b16 %v237, %v237
    %v254 = vpack.c.b16 %v238, %v238
    %v255 = vpack.c.b16 %v239, %v239
    %v256 = vpack.c.b16 %v240, %v240
    %v257 = vpack.c.b16 %v241, %v241
    %v258 = vpack.c.b16 %v242, %v242
    %v259 = vpack.c.b16 %v243, %v243
    %v260 = vpack.c.b16 %v244, %v244
    %v261 = vpack.c.b16 %v245, %v245
    %v262 = vpack.c.b16 %v246, %v246
    %279 = vst [vmem:[#allocation5] sm:$0xf] %v247
    %280 = vst [vmem:[#allocation5 + $0x4] sm:$0xf] %v248
    %281 = vst [vmem:[#allocation5 + $0x8] sm:$0xf] %v249
    %282 = vst [vmem:[#allocation5 + $0xc] sm:$0xf] %v250
    %283 = vst [vmem:[#allocation5 + $0x10] sm:$0xf] %v251
    %284 = vst [vmem:[#allocation5 + $0x14] sm:$0xf] %v252
    %285 = vst [vmem:[#allocation5 + $0x18] sm:$0xf] %v253
    %286 = vst [vmem:[#allocation5 + $0x1c] sm:$0xf] %v254
    %287 = vst [vmem:[#allocation5 + $0x20] sm:$0xf] %v255
    %288 = vst [vmem:[#allocation5 + $0x24] sm:$0xf] %v256
    %289 = vst [vmem:[#allocation5 + $0x28] sm:$0xf] %v257
    %290 = vst [vmem:[#allocation5 + $0x2c] sm:$0xf] %v258
    %291 = vst [vmem:[#allocation5 + $0x30] sm:$0xf] %v259
    %292 = vst [vmem:[#allocation5 + $0x34] sm:$0xf] %v260
    %293 = vst [vmem:[#allocation5 + $0x38] sm:$0xf] %v261
    %294 = vst [vmem:[#allocation5 + $0x3c] sm:$0xf] %v262
    // Predicated region
    $region10: #{tpu_custom_call.1} parent=1 // pred_check
      _
    $region11: #{tpu_custom_call.1} parent=1 // pred_check_branch
      %296 = sbr.rel (0) target = $region13
    $region12: #{tpu_custom_call.1} parent=1 // pred_region
      %s298 = ssub.s32 1024, 1024
      %299 = vsyncadd [#allocation4], %s298
      %s300 = sshll.u32 [#allocation5], 4
      %s301 = int_to_ptr.vmem [resolvable:$true] %s300
      %306 = dma.vmem_to_hbm [thread:$0]  %s301, 1024, %s1, [#allocation4], 64, 64, 4
    $region13: #{tpu_custom_call.1} parent=1 // pred_fallthru
      _
    // Predicated region
    $region14: #{tpu_custom_call.1} parent=1 // pred_check
      _
    $region15: #{tpu_custom_call.1} parent=1 // pred_check_branch
      %308 = sbr.rel (0) target = $region17
    $region16: #{tpu_custom_call.1} parent=1 // pred_region
      %309 = dma.done [#allocation4], 1024
    $region17: #{tpu_custom_call.1} parent=1 // pred_fallthru
      _
    %310 = vsyncpa [#allocation3], 1
    %311 = vsyncpa [#allocation4], 1

</llo_original>
